<compile_context>
chip_gen: v5e
topology: v5e:2x2
jax: 0.10.0
libtpu: 0.0.40
codegen_flags: <defaults>
</compile_context>

<pallas_src>
import functools

import jax
import jax.numpy as jnp
from jax.experimental import pallas as pl
from jax.experimental.pallas import tpu as pltpu

# Budget for the double-buffered input+output blocks; fits every TPU
# generation once the scoped VMEM limit is raised to _VMEM_LIMIT_BYTES
# (<= v7x's 64 MiB physical, <= v5e/v6e 128 MiB physical).
_DATA_BUDGET_BYTES = 24 * 1024 * 1024
_VMEM_LIMIT_BYTES = 32 * 1024 * 1024
_MIN_GRID_STEPS = 8  # enough steps for pipelining + v7x megacore sharding


def _round_down8(v):
    return (v // 8) * 8


def _round_up8(v):
    return ((v + 7) // 8) * 8


def _avgpool_kernel(x_ref, o_ref, *, ks, hw):
    # x_ref block: (tr, ks*hw)   o_ref block: (tr, hw)
    # Accumulate the ks lane-chunks directly off the Ref (static slices are
    # zero-cost views) so only one chunk + the f32 accumulator are live and
    # Mosaic can interleave the vld stream with the VPU adds.
    acc = x_ref[:, 0:hw].astype(jnp.float32)
    for j in range(1, ks):
        acc = acc + x_ref[:, j * hw:(j + 1) * hw].astype(jnp.float32)
    o_ref[...] = (acc * (1.0 / ks)).astype(o_ref.dtype)


def _pick_row_tile(rows, ks, hw, itemsize, steps_other_axes=1):
    """VMEM-budget-aware row tile: multiple of 8 (or the full row extent)."""
    bytes_per_row = 2 * (ks + 1) * hw * itemsize  # 2x: double-buffered in+out
    tr = _round_down8(max(8, _DATA_BUDGET_BYTES // bytes_per_row))
    tr = min(tr, _round_up8(rows))
    if rows < 8:
        return rows  # full-extent block satisfies the (8,128) rule
    # Guarantee multiple grid steps so the pipeline / both v7x cores have work.
    while tr > 8 and pl.cdiv(rows, tr) * steps_other_axes < _MIN_GRID_STEPS:
        tr = max(8, _round_down8(tr // 2))
    return tr


def undirect_avg_pool(x, ks):
    """AvgPool3d(kernel_size=[ks, 1, 1]) on an (N, C, D, H, W) tensor."""
    N, C, D, H, W = x.shape
    d_out = D // ks                      # PyTorch floor behavior (no padding)
    assert d_out >= 1, "depth smaller than pooling window"
    hw = H * W
    nc = N * C
    itemsize = jnp.dtype(x.dtype).itemsize

    cost = pl.CostEstimate(
        flops=nc * d_out * hw * ks,
        transcendentals=0,
        bytes_accessed=nc * d_out * (ks + 1) * hw * itemsize,
    )
    kernel = functools.partial(_avgpool_kernel, ks=ks, hw=hw)

    if hw % 128 == 0:
        # Lane-aligned primary path. reshape(N*C, D*hw) is always a pure view;
        # the ragged depth tail (D % ks planes) is never read by the grid.
        xr = x.reshape(nc, D * hw)
        tr = _pick_row_tile(nc, ks, hw, itemsize, steps_other_axes=d_out)
        grid = (pl.cdiv(nc, tr), d_out)
        out = pl.pallas_call(
            kernel,
            out_shape=jax.ShapeDtypeStruct((nc, d_out * hw), x.dtype),
            grid_spec=pltpu.PrefetchScalarGridSpec(
                num_scalar_prefetch=0,
                grid=grid,
                in_specs=[pl.BlockSpec((tr, ks * hw), lambda i, j: (i, j))],
                out_specs=pl.BlockSpec((tr, hw), lambda i, j: (i, j)),
            ),
            compiler_params=pltpu.CompilerParams(
                dimension_semantics=("parallel", "parallel"),
                vmem_limit_bytes=_VMEM_LIMIT_BYTES),
            cost_estimate=cost,
        )(xr)
        return out.reshape(N, C, d_out, H, W)

    # Fallback for hw % 128 != 0: (N*C*d_out, ks*hw) rows. Correct for any hw
    # (block last dims equal the full array dims); only the in-kernel hw-sized
    # chunks are lane-unaligned.
    # TODO(synk): pad hw up to a multiple of 128 in the wrapper for lane-dense
    # stores in the unaligned case.
    xr = x[:, :, :d_out * ks].reshape(nc * d_out, ks * hw)
    rows = nc * d_out
    tr = _pick_row_tile(rows, ks, hw, itemsize)
    grid = (pl.cdiv(rows, tr),)
    out = pl.pallas_call(
        kernel,
        out_shape=jax.ShapeDtypeStruct((rows, hw), x.dtype),
        grid_spec=pltpu.PrefetchScalarGridSpec(
            num_scalar_prefetch=0,
            grid=grid,
            in_specs=[pl.BlockSpec((tr, ks * hw), lambda i: (i, 0))],
            out_specs=pl.BlockSpec((tr, hw), lambda i: (i, 0)),
        ),
        compiler_params=pltpu.CompilerParams(
            dimension_semantics=("parallel",),
            vmem_limit_bytes=_VMEM_LIMIT_BYTES),
        cost_estimate=cost,
    )(xr)
    return out.reshape(N, C, d_out, H, W)


if __name__ == "__main__":
    key = jax.random.PRNGKey(0)

    # 1) Module-consistent small shapes: 5-D input, D=8, ks=2 (aligned path).
    N, C, D, H, W = 2, 4, 8, 16, 16
    ks = 2
    x = jax.random.normal(key, (N, C, D, H, W), jnp.float32)
    out = jax.block_until_ready(undirect_avg_pool(x, ks))
    assert out.shape == (N, C, D // ks, H, W), out.shape
    ref = x.reshape(N, C, D // ks, ks, H, W).mean(axis=3)
    assert jnp.allclose(out, ref, atol=1e-6, rtol=1e-6)

    # 2) Ragged depth (D % ks != 0): tail planes dropped, no pre-kernel copy.
    x2 = jax.random.normal(jax.random.PRNGKey(1), (2, 3, 7, 16, 16),
                           jnp.float32)
    out2 = jax.block_until_ready(undirect_avg_pool(x2, 2))
    ref2 = x2[:, :, :6].reshape(2, 3, 3, 2, 16, 16).mean(axis=3)
    assert out2.shape == ref2.shape
    assert jnp.allclose(out2, ref2, atol=1e-6, rtol=1e-6)

    # 3) Lane-unaligned hw exercises the fallback layout.
    x3 = jax.random.normal(jax.random.PRNGKey(2), (2, 4, 6, 6, 10),
                           jnp.float32)
    out3 = jax.block_until_ready(undirect_avg_pool(x3, 3))
    ref3 = x3.reshape(2, 4, 2, 3, 6, 10).mean(axis=3)
    assert out3.shape == ref3.shape
    assert jnp.allclose(out3, ref3, atol=1e-6, rtol=1e-6)

    print("KERNEL_OK")
</pallas_src>

<mosaic_0001>
module attributes {stable_mosaic.version = 11 : i64} {
  func.func @_avgpool_kernel(%arg0: i32, %arg1: i32, %arg2: memref<8x512xf32, #tpu.memory_space<vmem>>, %arg3: memref<8x256xf32, #tpu.memory_space<vmem>>) attributes {dimension_semantics = [#tpu.dimension_semantics<parallel>, #tpu.dimension_semantics<parallel>], iteration_bounds = array<i64: 1, 4>, scalar_prefetch = 0 : i64, scratch_operands = 0 : i64, tpu.core_type = #tpu.core_type<tc>, window_params = [{transform_indices = @transform_0, window_bounds = array<i64: 8, 512>}, {transform_indices = @transform_1, window_bounds = array<i64: 8, 256>}]} {
    %c0 = arith.constant 0 : index
    %c0_0 = arith.constant 0 : index
    %0 = vector.load %arg2[%c0, %c0_0] : memref<8x512xf32, #tpu.memory_space<vmem>>, vector<8x256xf32>
    %c0_1 = arith.constant 0 : index
    %c256 = arith.constant 256 : index
    %1 = vector.load %arg2[%c0_1, %c256] : memref<8x512xf32, #tpu.memory_space<vmem>>, vector<8x256xf32>
    %2 = arith.addf %0, %1 : vector<8x256xf32>
    %cst = arith.constant 5.000000e-01 : f32
    %3 = vector.broadcast %cst : f32 to vector<8x256xf32>
    %4 = arith.mulf %2, %3 : vector<8x256xf32>
    %c0_2 = arith.constant 0 : index
    %c0_3 = arith.constant 0 : index
    %5 = vector.load %arg3[%c0_2, %c0_3] : memref<8x256xf32, #tpu.memory_space<vmem>>, vector<8x256xf32>
    tpu.vector_store %arg3[%c0_2, %c0_3], %4 {strides = array<i32>} : memref<8x256xf32, #tpu.memory_space<vmem>>, vector<8x256xf32>,
    return
  }
  func.func @transform_0(%arg0: i32, %arg1: i32) -> (i32, i32) {
    %c0_i32 = arith.constant 0 : i32
    return %arg0, %arg1 : i32, i32
  }
  func.func @transform_1(%arg0: i32, %arg1: i32) -> (i32, i32) {
    %c0_i32 = arith.constant 0 : i32
    return %arg0, %arg1 : i32, i32
  }
}

</mosaic_0001>

<llo_original>
// kernel: tpu_custom_call.1
$region0: #{tpu_custom_call.1}
  #allocation0 [shape = 'u32[]', space=smem, size = 0x4, offset = 0x4, fixed_abs, tag = 'smem constant byte address 0x4 - core index']
  #allocation1 [shape = 'u32[72,128]{1,0:T(1,128)}', space=vmem, size = 0x9000, scoped, tag = 'internal scratch']
  %s0 = inlined_call_operand.hbm [shape: f32[8,2048], index: 0, kind: input, shape index: {}]
  %s1 = inlined_call_operand.hbm [shape: f32[8,1024], index: 1, kind: output, shape index: {}]
  %s2 = sld [smem:[#allocation0]]
  $region41: #{tpu_custom_call.1} parent=0
    _
  %s4 = ssub.s32 1, %s2
  %s5 = scalar_select 0, %s4, %s2
  $region1: #{tpu_custom_call.1} parent=0
    #allocation2 [shape = 'u8[32768]{0}', space=vmem, size = 0x8000, scoped, tag = 'input window, operand 0']
    #allocation3 [shape = 's32[2]{0}', space=sflag, size = 0x8, scoped, tag = 'scoped memory for tpu_custom_call.1']
    #allocation4 [shape = 's32[2]{0}', space=sflag, size = 0x8, scoped, tag = 'scoped memory for tpu_custom_call.1']
    #allocation5 [shape = 'u8[16384]{0}', space=vmem, size = 0x4000, scoped, tag = 'output window, operand 0']
    %6 = vsyncpa [#allocation3], 0
    %s7 = scalar_lea.sflag [#allocation3], 1
    %8 = vsyncpa %s7, 0
    %9 = vsyncpa [#allocation4], 0
    %s10 = scalar_lea.sflag [#allocation4], 1
    %11 = vsyncpa %s10, 0
    loop: start=0, step=1, limit=6
    $region2: #{tpu_custom_call.1} parent=1 // loop_pre_header
      _
    $region3: #{tpu_custom_call.1} parent=1 // loop_header
      %s13 = sphi 0, %s17
      %p14 = scmp.ge.s32.totalorder %s13, 6
      %s20 = sphi 0, %s32
      %s21 = sphi 0, %s28
      %s22 = sphi 0, %s20
      %s23 = sphi 0, %s21
      %s24 = sphi 0, %s22
      %s25 = sphi 0, %s23
      %s37 = sphi 0, %s39
      %s40 = sphi 0, %s37
      %s41 = sphi 0, %s40
      %s57 = sphi 0, %s41
      %s65 = sphi 0, %s67
      %s68 = sphi 0, %s65
      %s69 = sphi 0, %s68
      %s85 = sphi 0, %s69
    $region4: #{tpu_custom_call.1} parent=1 // loop_header_branch
      %16 = sbr.rel (%p14) target = $region8
    $region5: #{tpu_custom_call.1} parent=1 // loop_body
      %s18 = ssub.s32 %s13, 1
      %s19 = ssub.s32 %s13, 2
      %s26 = sadd.s32 1, %s21
      %p27 = scmp.ge.s32.totalorder %s26, 4
      %s28 = scalar_select %p27, 0, %s26
      %s29 = sadd.s32 1, %s20
      %s30 = scalar_select %p27, %s29, %s20
      %p31 = scmp.ge.s32.totalorder %s30, 1
      %s32 = scalar_select %p31, 0, %s30
      %s33 = ssub.s32 %s20, %s32
      %s34 = ssub.s32 %s21, %s28
      %s35 = sor.u32 %s33, %s34
      %p36 = scmp.eq.s32.totalorder %s35, 0
      %s38 = sadd.s32 %s37, 1
      %s39 = scalar_select %p36, %s37, %s38
      %p42 = pneg %p36
      %p43 = scmp.eq.s32.totalorder %s13, 3
      %p44 = por %p42, %p43
      %p45 = scmp.ne.s32.totalorder %s37, %s40
      %p46 = scmp.eq.s32.totalorder %s13, 0
      %p47 = por %p45, %p46
      %p48 = scmp.ne.s32.totalorder %s37, %s40
      %p49 = scmp.eq.s32.totalorder %s18, 3
      %p50 = por %p48, %p49
      %p51 = scmp.ne.s32.totalorder %s40, %s41
      %p52 = scmp.eq.s32.totalorder %s18, 0
      %p53 = por %p51, %p52
      %p54 = scmp.ne.s32.totalorder %s40, %s41
      %p55 = scmp.eq.s32.totalorder %s19, 3
      %p56 = por %p54, %p55
      %p58 = scmp.ne.s32.totalorder %s41, %s57
      %p59 = scmp.eq.s32.totalorder %s19, 0
      %p60 = por %p58, %p59
      %s61 = ssub.s32 %s20, %s32
      %s62 = ssub.s32 %s21, %s28
      %s63 = sor.u32 %s61, %s62
      %p64 = scmp.eq.s32.totalorder %s63, 0
      %s66 = sadd.s32 %s65, 1
      %s67 = scalar_select %p64, %s65, %s66
      %p70 = pneg %p64
      %p71 = scmp.eq.s32.totalorder %s13, 3
      %p72 = por %p70, %p71
      %p73 = scmp.ne.s32.totalorder %s65, %s68
      %p74 = scmp.eq.s32.totalorder %s13, 0
      %p75 = por %p73, %p74
      %p76 = scmp.ne.s32.totalorder %s65, %s68
      %p77 = scmp.eq.s32.totalorder %s18, 3
      %p78 = por %p76, %p77
      %p79 = scmp.ne.s32.totalorder %s68, %s69
      %p80 = scmp.eq.s32.totalorder %s18, 0
      %p81 = por %p79, %p80
      %p82 = scmp.ne.s32.totalorder %s68, %s69
      %p83 = scmp.eq.s32.totalorder %s19, 3
      %p84 = por %p82, %p83
      %p86 = scmp.ne.s32.totalorder %s69, %s85
      %p87 = scmp.eq.s32.totalorder %s19, 0
      %p88 = por %p86, %p87
      %p89 = scmp.le.s32.totalorder 1, %s13
      %p90 = scmp.lt.s32.totalorder %s13, 5
      %p91 = pnand %p89, %p90
      %p92 = pneg %p91
      // Predicated region
      $region9: #{tpu_custom_call.1} parent=5 // pred_check
        _
      $region10: #{tpu_custom_call.1} parent=5 // pred_check_branch
        %94 = sbr.rel (%p91) target = $region12
      $region11: #{tpu_custom_call.1} parent=5 // pred_region
        %s95 = ssub.s32 %s13, 1
      $region12: #{tpu_custom_call.1} parent=5 // pred_fallthru
        _
      %p96 = scmp.lt.s32.totalorder %s13, 4
      // Predicated region
      $region13: #{tpu_custom_call.1} parent=5 // pred_check
        %p97 = pneg %p96
      $region14: #{tpu_custom_call.1} parent=5 // pred_check_branch
        %99 = sbr.rel (%p97) target = $region16
      $region15: #{tpu_custom_call.1} parent=5 // pred_region
        // Predicated region
        $region17: #{tpu_custom_call.1} parent=15 // pred_check
          %p100 = pneg %p47
        $region18: #{tpu_custom_call.1} parent=15 // pred_check_branch
          %102 = sbr.rel (%p100) target = $region20
        $region19: #{tpu_custom_call.1} parent=15 // pred_region
          %s103 = sand.u32 %s37, 1
          %s104 = scalar_lea.sflag [#allocation3], %s103
          %s105 = sand.u32 %s37, 1
          %s106 = smul.addr %s105, 32
          %s107 = scalar_lea.vmem [#allocation2], %s106
          %s108 = smul.u32 4, %s21
          %110 = vsyncadd %s104, 0
          %s111 = smul.addr %s20, 16
          %s112 = sadd.s32 %s108, %s111
          %s113 = smul.addr %s112, 8
          %s114 = scalar_lea.hbm %s0, %s113
          %s116 = sshll.u32 %s114, 4
          %s117 = int_to_ptr.hbm [resolvable:$true] %s116
          %s118 = sshll.u32 %s107, 4
          %s119 = int_to_ptr.vmem [resolvable:$true] %s118
          %121 = dma.hbm_to_vmem [thread:$0]  %s117, 512, %s119, %s104
        $region20: #{tpu_custom_call.1} parent=15 // pred_fallthru
          _
      $region16: #{tpu_custom_call.1} parent=5 // pred_fallthru
        _
      %p122 = scmp.le.s32.totalorder 1, %s13
      %p123 = scmp.lt.s32.totalorder %s13, 5
      %p124 = pnand %p122, %p123
      %p125 = pneg %p124
      // Predicated region
      $region21: #{tpu_custom_call.1} parent=5 // pred_check
        _
      $region22: #{tpu_custom_call.1} parent=5 // pred_check_branch
        %127 = sbr.rel (%p124) target = $region24
      $region23: #{tpu_custom_call.1} parent=5 // pred_region
        %s128 = ssub.s32 %s13, 1
        %s129 = sand.u32 %s40, 1
        %s130 = scalar_lea.sflag [#allocation3], %s129
        %s131 = sand.u32 %s40, 1
        %s132 = smul.addr %s131, 32
        %s133 = scalar_lea.vmem [#allocation2], %s132
        // Predicated region
        $region25: #{tpu_custom_call.1} parent=23 // pred_check
          %p134 = pneg %p53
        $region26: #{tpu_custom_call.1} parent=23 // pred_check_branch
          %136 = sbr.rel (%p134) target = $region28
        $region27: #{tpu_custom_call.1} parent=23 // pred_region
          %138 = dma.done %s130, 512
        $region28: #{tpu_custom_call.1} parent=23 // pred_fallthru
          _
        %s139 = sand.u32 %s40, 1
        %s140 = scalar_lea.sflag [#allocation3], %s139
        %s141 = sand.u32 %s40, 1
        %s142 = smul.addr %s141, 32
        %s143 = scalar_lea.vmem [#allocation2], %s142
        %p144 = pneg %p53
        %p145 = pneg %p50
        %p146 = pneg %p81
        %p147 = pneg %p78
        %s148 = sand.u32 %s68, 1
        %s149 = scalar_lea.sflag [#allocation4], %s148
        %s150 = sand.u32 %s68, 1
        %s151 = smul.addr %s150, 16
        %s152 = scalar_lea.vmem [#allocation5], %s151
        %s153 = smul.u32 4, %s23
        %s154 = smul.u32 2, %s23
        %v155 = vld [vmem:[%s133] sm:$0xff]
        %v156 = vld [vmem:[%s133 + $0x8] sm:$0xff]
        %v157 = vld [vmem:[%s133 + $0x10] sm:$0xff]
        %v158 = vld [vmem:[%s133 + $0x18] sm:$0xff]
        %v159 = vadd.f32 %v155, %v157
        %v160 = vadd.f32 %v156, %v158
        %v161 = vmul.f32 %v159, 0.5
        %v162 = vmul.f32 %v160, 0.5
        %163 = vst [vmem:[%s152] sm:$0xff] %v161
        %164 = vst [vmem:[%s152 + $0x8] sm:$0xff] %v162
        %s165 = sand.u32 %s68, 1
        %s166 = scalar_lea.sflag [#allocation4], %s165
        %s167 = sand.u32 %s68, 1
        %s168 = smul.addr %s167, 16
        %s169 = scalar_lea.vmem [#allocation5], %s168
        // Predicated region
        $region29: #{tpu_custom_call.1} parent=23 // pred_check
          %p170 = pneg %p78
        $region30: #{tpu_custom_call.1} parent=23 // pred_check_branch
          %172 = sbr.rel (%p170) target = $region32
        $region31: #{tpu_custom_call.1} parent=23 // pred_region
          %s173 = smul.u32 2, %s23
          %175 = vsyncadd %s166, 0
          %s176 = smul.addr %s22, 8
          %s177 = sadd.s32 %s173, %s176
          %s178 = smul.addr %s177, 8
          %s179 = scalar_lea.hbm %s1, %s178
          %s181 = sshll.u32 %s169, 4
          %s182 = int_to_ptr.vmem [resolvable:$true] %s181
          %s183 = sshll.u32 %s179, 4
          %s184 = int_to_ptr.hbm [resolvable:$true] %s183
          %186 = dma.vmem_to_hbm [thread:$0]  %s182, 256, %s184, %s166
        $region32: #{tpu_custom_call.1} parent=23 // pred_fallthru
          _
      $region24: #{tpu_custom_call.1} parent=5 // pred_fallthru
        _
      %p187 = scmp.le.s32.totalorder 2, %s13
      // Predicated region
      $region33: #{tpu_custom_call.1} parent=5 // pred_check
        %p188 = pneg %p187
      $region34: #{tpu_custom_call.1} parent=5 // pred_check_branch
        %190 = sbr.rel (%p188) target = $region36
      $region35: #{tpu_custom_call.1} parent=5 // pred_region
        %s191 = ssub.s32 %s13, 2
        // Predicated region
        $region37: #{tpu_custom_call.1} parent=35 // pred_check
          %p192 = pneg %p84
        $region38: #{tpu_custom_call.1} parent=35 // pred_check_branch
          %194 = sbr.rel (%p192) target = $region40
        $region39: #{tpu_custom_call.1} parent=35 // pred_region
          %s195 = sand.u32 %s69, 1
          %s196 = scalar_lea.sflag [#allocation4], %s195
          %s197 = sand.u32 %s69, 1
          %s198 = smul.addr %s197, 16
          %s199 = scalar_lea.vmem [#allocation5], %s198
          %201 = dma.done %s196, 256
        $region40: #{tpu_custom_call.1} parent=35 // pred_fallthru
          _
      $region36: #{tpu_custom_call.1} parent=5 // pred_fallthru
        _
    $region6: #{tpu_custom_call.1} parent=1 // loop_footer
      %s17 = sadd.s32 1, %s13
    $region7: #{tpu_custom_call.1} parent=1 // loop_footer_branch
      %12 = sbr.rel target = $region3
    $region8: #{tpu_custom_call.1} parent=1 // loop_exit
      _
    %202 = vsyncpa [#allocation3], 1
    %s203 = scalar_lea.sflag [#allocation3], 1
    %204 = vsyncpa %s203, 1
    %205 = vsyncpa [#allocation4], 1
    %s206 = scalar_lea.sflag [#allocation4], 1
    %207 = vsyncpa %s206, 1

</llo_original>
